<compile_context>
chip_gen: v6e
topology: v6e:2x2x1
jax: 0.10.0
libtpu: 0.0.40
codegen_flags: <defaults>
</compile_context>

<pallas_src>
import jax
import jax.numpy as jnp
from jax.experimental import pallas as pl
from jax.experimental.pallas import tpu as pltpu


def _round_up(x, m):
    return ((x + m - 1) // m) * m


def _cdiv(a, b):
    return (a + b - 1) // b


# ----------------------------- Pallas kernel -----------------------------

def _mixed_ae_kernel(idx_ref, cont_ref,
                     emb_enc_ref, cont_enc_ref, b_e1_ref,
                     w_e2_ref, b_e2_ref,
                     w_ed_ref, b_ed_ref,
                     w_d2_ref, b_d2_ref,
                     w_h_ref, b_h_ref,
                     out_ref):
    """One batch tile of the fused encoder -> decoder -> heads MLP.

    idx_ref:  (TB, n_feat) int32, categorical indices already offset-shifted
              into the combined vocab [0, sum(categorical_dims)).
    cont_ref: (TB, continuous_dim) f32.
    emb_enc_ref: (sum(categorical_dims), h0)  = concat_i(emb_i @ W_enc1[seg_i])
    cont_enc_ref: (continuous_dim, h0)        = W_enc1[continuous rows]
    w_ed_ref / b_ed_ref: fused enc3 @ dec1 weight/bias (h1, h1) / (1, h1).
    out_ref:  (TB, total_out) f32 — true head width, no lane padding.
    """
    tb = idx_ref.shape[0]
    n_feat = idx_ref.shape[1]
    total_cat = emb_enc_ref.shape[0]

    # Combined one-hot over the concatenated categorical vocab.  Features own
    # disjoint index ranges (offsets added in the wrapper), so OR-ing the
    # per-feature comparisons yields the concatenation of per-feature one-hots
    # with a single f32 convert at the end.
    iota = jax.lax.broadcasted_iota(jnp.int32, (tb, total_cat), 1)
    hot = iota == idx_ref[:, 0:1]
    for i in range(1, n_feat):  # static, tiny
        hot = hot | (iota == idx_ref[:, i:i + 1])
    onehot = hot.astype(jnp.float32)

    # Encoder layer 1 with the embedding gather fused into the matmul:
    #   x @ W_e1 = onehot @ (emb @ W_e1_cat) + cont @ W_e1_cont
    h = jnp.tanh(
        jnp.dot(onehot, emb_enc_ref[...], preferred_element_type=jnp.float32)
        + jnp.dot(cont_ref[...], cont_enc_ref[...],
                  preferred_element_type=jnp.float32)
        + b_e1_ref[...])
    # Encoder layer 2.
    h = jnp.tanh(jnp.dot(h, w_e2_ref[...],
                         preferred_element_type=jnp.float32) + b_e2_ref[...])
    # Fused enc3·dec1 (latent never materialized).
    d = jnp.tanh(jnp.dot(h, w_ed_ref[...],
                         preferred_element_type=jnp.float32) + b_ed_ref[...])
    # Decoder layer 2.
    d = jnp.tanh(jnp.dot(d, w_d2_ref[...],
                         preferred_element_type=jnp.float32) + b_d2_ref[...])
    # Fused output heads (all categorical heads + continuous head).
    out = jnp.dot(d, w_h_ref[...],
                  preferred_element_type=jnp.float32) + b_h_ref[...]
    out_ref[...] = out.astype(out_ref.dtype)


# ------------------------------ parameters --------------------------------

def init_params(key, categorical_dims, continuous_dim, embedding_dim,
                hidden_dims=(64, 32), latent_dim=16):
    """Deterministic synthetic parameter init (same shapes as the nn.Module)."""
    def linear(key, fan_in, fan_out):
        k_w, k_b = jax.random.split(key)
        bound = 1.0 / jnp.sqrt(fan_in)
        w = jax.random.uniform(k_w, (fan_in, fan_out), jnp.float32, -bound, bound)
        b = jax.random.uniform(k_b, (1, fan_out), jnp.float32, -bound, bound)
        return w, b

    keys = jax.random.split(key, 16)
    ki = iter(keys)

    embeddings = [jax.random.normal(next(ki), (n_cat, embedding_dim), jnp.float32)
                  for n_cat in categorical_dims]

    input_dim = embedding_dim * len(categorical_dims) + continuous_dim
    h0, h1 = hidden_dims

    params = {"embeddings": embeddings}
    params["enc1"] = linear(next(ki), input_dim, h0)
    params["enc2"] = linear(next(ki), h0, h1)
    params["enc3"] = linear(next(ki), h1, latent_dim)
    params["dec1"] = linear(next(ki), latent_dim, h1)
    params["dec2"] = linear(next(ki), h1, h0)
    params["cat_heads"] = [linear(next(ki), h0, dim) for dim in categorical_dims]
    params["cont_head"] = linear(next(ki), h0, continuous_dim)
    return params


def fuse_params(params, categorical_dims, continuous_dim, embedding_dim):
    """One-time (init-time) fusion of params for the Pallas kernel.

    - Pre-multiplies each embedding table by its slice of the first encoder
      weight so the in-kernel gather is a one-hot matmul.
    - Fuses enc3 @ dec1 (no nonlinearity in between) into a single (h1, h1)
      projection; the latent is never materialized (forward() does not return it).
    - Concatenates all output heads into one (h0, total_out) projection.
    """
    n_feat = len(categorical_dims)
    total_emb = embedding_dim * n_feat
    w_e1, b_e1 = params["enc1"]

    emb_enc_blocks = []
    for i in range(n_feat):
        seg = w_e1[i * embedding_dim:(i + 1) * embedding_dim, :]   # (E, h0)
        emb_enc_blocks.append(params["embeddings"][i] @ seg)        # (n_cat_i, h0)
    emb_enc_w = jnp.concatenate(emb_enc_blocks, axis=0)             # (sum n_cat, h0)
    cont_enc_w = w_e1[total_emb:, :]                                # (cont_dim, h0)

    # enc3 · dec1 fusion.
    w_e3, b_e3 = params["enc3"]
    w_d1, b_d1 = params["dec1"]
    w_ed = w_e3 @ w_d1                                              # (h1, h1)
    b_ed = b_e3 @ w_d1 + b_d1                                       # (1, h1)

    # Fused output head at its true width (no lane padding — keeps writeback small).
    w_h = jnp.concatenate([w for (w, _) in params["cat_heads"]]
                          + [params["cont_head"][0]], axis=1)
    b_h = jnp.concatenate([b for (_, b) in params["cat_heads"]]
                          + [params["cont_head"][1]], axis=1)
    total_out = int(w_h.shape[1])

    offsets = []
    acc = 0
    for d in categorical_dims:
        offsets.append(acc)
        acc += d
    offsets = jnp.asarray(offsets, jnp.int32)

    return {
        "offsets": offsets,
        "emb_enc_w": emb_enc_w, "cont_enc_w": cont_enc_w, "b_e1": b_e1,
        "w_e2": params["enc2"][0], "b_e2": params["enc2"][1],
        "w_ed": w_ed, "b_ed": b_ed,
        "w_d2": params["dec2"][0], "b_d2": params["dec2"][1],
        "head_w": w_h, "head_b": b_h,
        "total_out": total_out,
    }


# ------------------------------ forward -----------------------------------

def _vmem_bytes_estimate(tb, n_feat, cont_dim, total_out, total_cat, h0, h1):
    """Rough padded-VMEM footprint (f32, (8,128) tiling, double-buffered I/O)."""
    def tile(r, c):
        return _round_up(max(int(r), 1), 8) * _round_up(max(int(c), 1), 128) * 4
    io = 2 * (tile(tb, n_feat) + tile(tb, cont_dim) + tile(tb, total_out))
    w = (tile(total_cat, h0) + tile(cont_dim, h0) + tile(1, h0)
         + tile(h0, h1) + tile(1, h1) + tile(h1, h1) + tile(1, h1)
         + tile(h1, h0) + tile(1, h0) + tile(h0, total_out) + tile(1, total_out))
    act = tile(tb, total_cat) + 2 * tile(tb, h0) + 2 * tile(tb, h1) + tile(tb, total_out)
    return io + w + act


def mixed_autoencoder_forward(fused, categorical_inputs, continuous_input,
                              categorical_dims, continuous_dim, max_tb=2048):
    """Returns (list_of_categorical_logits, continuous_output)."""
    B = categorical_inputs.shape[0]
    n_feat = len(categorical_dims)
    total_out = fused["total_out"]
    total_cat = fused["emb_enc_w"].shape[0]
    h0 = fused["b_e1"].shape[1]
    h1 = fused["b_e2"].shape[1]

    # Shift indices into the combined categorical vocab (tiny int add).
    idx = categorical_inputs.astype(jnp.int32) + fused["offsets"][None, :]
    cont = continuous_input.astype(jnp.float32)

    # Tile sizing: right-size TB to the batch so the tail tile isn't mostly
    # padding; keep >= 2 grid steps when the batch allows it so v7x megacore
    # can shard the "parallel" axis across both TensorCores; 8-row aligned.
    num_steps = max(_cdiv(B, max_tb), 1)
    if num_steps == 1 and B >= 16:
        num_steps = 2
    TB = _round_up(_cdiv(B, num_steps), 8)
    num_steps = _cdiv(B, TB)
    Bp = TB * num_steps
    if Bp != B:  # only pad when strictly needed (extra HBM pass otherwise)
        idx = jnp.pad(idx, ((0, Bp - B), (0, 0)))
        cont = jnp.pad(cont, ((0, Bp - B), (0, 0)))

    weights = (fused["emb_enc_w"], fused["cont_enc_w"], fused["b_e1"],
               fused["w_e2"], fused["b_e2"],
               fused["w_ed"], fused["b_ed"],
               fused["w_d2"], fused["b_d2"],
               fused["head_w"], fused["head_b"])

    def row_spec(width):
        return pl.BlockSpec((TB, width), lambda i: (i, 0))

    def resident_spec(arr):
        # Same block every step -> weights stay resident in VMEM, no re-DMA.
        return pl.BlockSpec(arr.shape, lambda i: (0, 0))

    # Advisory cost estimate so XLA schedules surrounding ops sensibly.
    flops = 2 * Bp * (total_cat * h0 + continuous_dim * h0
                      + h0 * h1 + h1 * h1 + h1 * h0 + h0 * total_out)
    transcendentals = Bp * (2 * h0 + 2 * h1)
    weight_bytes = sum(int(w.size) * 4 for w in weights)
    bytes_accessed = Bp * 4 * (n_feat + continuous_dim + total_out) + weight_bytes
    cost = pl.CostEstimate(flops=int(flops),
                           transcendentals=int(transcendentals),
                           bytes_accessed=int(bytes_accessed))

    # Raise the scoped-VMEM limit only when a large TB would exceed the v5e
    # default (16 MiB); harmless no-op for the small demo shapes.
    cp_kwargs = dict(dimension_semantics=("parallel",))
    vmem_est = _vmem_bytes_estimate(TB, n_feat, continuous_dim, total_out,
                                    total_cat, h0, h1)
    if vmem_est > 16 * 1024 * 1024:
        cp_kwargs["vmem_limit_bytes"] = min(2 * vmem_est, 48 * 1024 * 1024)

    out = pl.pallas_call(
        _mixed_ae_kernel,
        out_shape=jax.ShapeDtypeStruct((Bp, total_out), jnp.float32),
        grid=(num_steps,),
        in_specs=[row_spec(n_feat), row_spec(continuous_dim)]
                 + [resident_spec(w) for w in weights],
        out_specs=row_spec(total_out),   # block last-dim == full array dim (legal)
        compiler_params=pltpu.CompilerParams(**cp_kwargs),
        cost_estimate=cost,
    )(idx, cont, *weights)

    out = out[:B]
    cat_outputs = []
    off = 0
    for dim in categorical_dims:
        cat_outputs.append(out[:, off:off + dim])
        off += dim
    cont_output = out[:, off:off + continuous_dim]
    return cat_outputs, cont_output


# -------------------------- pure-JAX reference -----------------------------

def _reference_forward(params, categorical_inputs, continuous_input,
                       categorical_dims, continuous_dim):
    embedded = [params["embeddings"][i][categorical_inputs[:, i]]
                for i in range(len(categorical_dims))]
    x = jnp.concatenate(embedded + [continuous_input.astype(jnp.float32)], axis=1)
    h = jnp.tanh(x @ params["enc1"][0] + params["enc1"][1])
    h = jnp.tanh(h @ params["enc2"][0] + params["enc2"][1])
    latent = h @ params["enc3"][0] + params["enc3"][1]
    d = jnp.tanh(latent @ params["dec1"][0] + params["dec1"][1])
    d = jnp.tanh(d @ params["dec2"][0] + params["dec2"][1])
    cat_outputs = [d @ w + b for (w, b) in params["cat_heads"]]
    cont_output = d @ params["cont_head"][0] + params["cont_head"][1]
    return cat_outputs, cont_output


# --------------------------------- main ------------------------------------

if __name__ == "__main__":
    categorical_dims = [5, 7, 9]     # 3 categorical features
    continuous_dim = 6
    embedding_dim = 4
    hidden_dims = (64, 32)
    latent_dim = 16
    batch = 20                       # exercises grid tiling + tail padding
    demo_max_tb = 8                  # small tile for the demo; 2048 default in prod

    key = jax.random.PRNGKey(0)
    k_params, k_cat, k_cont = jax.random.split(key, 3)

    params = init_params(k_params, categorical_dims, continuous_dim,
                         embedding_dim, hidden_dims, latent_dim)
    fused = fuse_params(params, categorical_dims, continuous_dim, embedding_dim)

    cat_cols = []
    for i, n_cat in enumerate(categorical_dims):
        cat_cols.append(jax.random.randint(jax.random.fold_in(k_cat, i),
                                           (batch, 1), 0, n_cat))
    categorical_inputs = jnp.concatenate(cat_cols, axis=1).astype(jnp.int32)
    continuous_input = jax.random.normal(k_cont, (batch, continuous_dim),
                                         jnp.float32)

    cat_outs, cont_out = mixed_autoencoder_forward(
        fused, categorical_inputs, continuous_input,
        categorical_dims, continuous_dim, max_tb=demo_max_tb)
    jax.block_until_ready(cont_out)
    for c in cat_outs:
        jax.block_until_ready(c)

    # correctness check vs pure-JAX reference (unfused formulation)
    cat_ref, cont_ref = _reference_forward(
        params, categorical_inputs, continuous_input,
        categorical_dims, continuous_dim)
    for a, b in zip(cat_outs, cat_ref):
        assert jnp.allclose(a, b, atol=1e-4, rtol=1e-3), "categorical head mismatch"
    assert jnp.allclose(cont_out, cont_ref, atol=1e-4, rtol=1e-3), "continuous mismatch"

    print("KERNEL_OK")
</pallas_src>

<mosaic_0001>
module attributes {stable_mosaic.version = 11 : i64} {
  func.func @_mixed_ae_kernel(%arg0: i32, %arg1: memref<8x3xi32, #tpu.memory_space<vmem>>, %arg2: memref<8x6xf32, #tpu.memory_space<vmem>>, %arg3: memref<21x64xf32, #tpu.memory_space<vmem>>, %arg4: memref<6x64xf32, #tpu.memory_space<vmem>>, %arg5: memref<1x64xf32, #tpu.memory_space<vmem>>, %arg6: memref<64x32xf32, #tpu.memory_space<vmem>>, %arg7: memref<1x32xf32, #tpu.memory_space<vmem>>, %arg8: memref<32x32xf32, #tpu.memory_space<vmem>>, %arg9: memref<1x32xf32, #tpu.memory_space<vmem>>, %arg10: memref<32x64xf32, #tpu.memory_space<vmem>>, %arg11: memref<1x64xf32, #tpu.memory_space<vmem>>, %arg12: memref<64x27xf32, #tpu.memory_space<vmem>>, %arg13: memref<1x27xf32, #tpu.memory_space<vmem>>, %arg14: memref<8x27xf32, #tpu.memory_space<vmem>>) attributes {dimension_semantics = [#tpu.dimension_semantics<parallel>], iteration_bounds = array<i64: 3>, scalar_prefetch = 0 : i64, scratch_operands = 0 : i64, tpu.core_type = #tpu.core_type<tc>, window_params = [{transform_indices = @transform_0, window_bounds = array<i64: 8, 3>}, {transform_indices = @transform_1, window_bounds = array<i64: 8, 6>}, {pipeline_mode = #tpu.pipeline_mode<synchronous>, transform_indices = @transform_2, window_bounds = array<i64: 21, 64>}, {pipeline_mode = #tpu.pipeline_mode<synchronous>, transform_indices = @transform_3, window_bounds = array<i64: 6, 64>}, {pipeline_mode = #tpu.pipeline_mode<synchronous>, transform_indices = @transform_4, window_bounds = array<i64: 1, 64>}, {pipeline_mode = #tpu.pipeline_mode<synchronous>, transform_indices = @transform_5, window_bounds = array<i64: 64, 32>}, {pipeline_mode = #tpu.pipeline_mode<synchronous>, transform_indices = @transform_6, window_bounds = array<i64: 1, 32>}, {pipeline_mode = #tpu.pipeline_mode<synchronous>, transform_indices = @transform_7, window_bounds = array<i64: 32, 32>}, {pipeline_mode = #tpu.pipeline_mode<synchronous>, transform_indices = @transform_8, window_bounds = array<i64: 1, 32>}, {pipeline_mode = #tpu.pipeline_mode<synchronous>, transform_indices = @transform_9, window_bounds = array<i64: 32, 64>}, {pipeline_mode = #tpu.pipeline_mode<synchronous>, transform_indices = @transform_10, window_bounds = array<i64: 1, 64>}, {pipeline_mode = #tpu.pipeline_mode<synchronous>, transform_indices = @transform_11, window_bounds = array<i64: 64, 27>}, {pipeline_mode = #tpu.pipeline_mode<synchronous>, transform_indices = @transform_12, window_bounds = array<i64: 1, 27>}, {transform_indices = @transform_13, window_bounds = array<i64: 8, 27>}]} {
    %0 = tpu.iota {dimensions = array<i32: 1>} : vector<8x21xi32>
    %c0 = arith.constant 0 : index
    %c0_0 = arith.constant 0 : index
    %1 = vector.load %arg1[%c0, %c0_0] : memref<8x3xi32, #tpu.memory_space<vmem>>, vector<8x1xi32>
    %2 = vector.broadcast %1 : vector<8x1xi32> to vector<8x21xi32>
    %3 = arith.cmpi eq, %0, %2 : vector<8x21xi32>
    %c0_1 = arith.constant 0 : index
    %c1 = arith.constant 1 : index
    %4 = vector.load %arg1[%c0_1, %c1] : memref<8x3xi32, #tpu.memory_space<vmem>>, vector<8x1xi32>
    %5 = vector.broadcast %4 : vector<8x1xi32> to vector<8x21xi32>
    %6 = arith.cmpi eq, %0, %5 : vector<8x21xi32>
    %7 = arith.ori %3, %6 : vector<8x21xi1>
    %c0_2 = arith.constant 0 : index
    %c2 = arith.constant 2 : index
    %8 = vector.load %arg1[%c0_2, %c2] : memref<8x3xi32, #tpu.memory_space<vmem>>, vector<8x1xi32>
    %9 = vector.broadcast %8 : vector<8x1xi32> to vector<8x21xi32>
    %10 = arith.cmpi eq, %0, %9 : vector<8x21xi32>
    %11 = arith.ori %7, %10 : vector<8x21xi1>
    %12 = arith.extui %11 : vector<8x21xi1> to vector<8x21xi32>
    %13 = arith.sitofp %12 : vector<8x21xi32> to vector<8x21xf32>
    %c0_3 = arith.constant 0 : index
    %c0_4 = arith.constant 0 : index
    %14 = vector.load %arg3[%c0_3, %c0_4] : memref<21x64xf32, #tpu.memory_space<vmem>>, vector<21x64xf32>
    %cst = arith.constant dense<0.000000e+00> : vector<8x64xf32>
    %15 = tpu.matmul %13, %14, %cst {dimension_numbers = #tpu.dot_dimension_numbers<[1], [0], [0], [1], [0, 0, 1, 1], [], []>} : vector<8x21xf32>, vector<21x64xf32>, vector<8x64xf32> -> vector<8x64xf32>
    %c0_5 = arith.constant 0 : index
    %c0_6 = arith.constant 0 : index
    %16 = vector.load %arg2[%c0_5, %c0_6] : memref<8x6xf32, #tpu.memory_space<vmem>>, vector<8x6xf32>
    %c0_7 = arith.constant 0 : index
    %c0_8 = arith.constant 0 : index
    %17 = vector.load %arg4[%c0_7, %c0_8] : memref<6x64xf32, #tpu.memory_space<vmem>>, vector<6x64xf32>
    %cst_9 = arith.constant dense<0.000000e+00> : vector<8x64xf32>
    %18 = tpu.matmul %16, %17, %cst_9 {dimension_numbers = #tpu.dot_dimension_numbers<[1], [0], [0], [1], [0, 0, 1, 1], [], []>} : vector<8x6xf32>, vector<6x64xf32>, vector<8x64xf32> -> vector<8x64xf32>
    %19 = arith.addf %15, %18 : vector<8x64xf32>
    %c0_10 = arith.constant 0 : index
    %c0_11 = arith.constant 0 : index
    %20 = vector.load %arg5[%c0_10, %c0_11] : memref<1x64xf32, #tpu.memory_space<vmem>>, vector<1x64xf32>
    %21 = vector.broadcast %20 : vector<1x64xf32> to vector<8x64xf32>
    %22 = arith.addf %19, %21 : vector<8x64xf32>
    %23 = math.tanh %22 : vector<8x64xf32>
    %c0_12 = arith.constant 0 : index
    %c0_13 = arith.constant 0 : index
    %24 = vector.load %arg6[%c0_12, %c0_13] : memref<64x32xf32, #tpu.memory_space<vmem>>, vector<64x32xf32>
    %cst_14 = arith.constant dense<0.000000e+00> : vector<8x32xf32>
    %25 = tpu.matmul %23, %24, %cst_14 {dimension_numbers = #tpu.dot_dimension_numbers<[1], [0], [0], [1], [0, 0, 1, 1], [], []>} : vector<8x64xf32>, vector<64x32xf32>, vector<8x32xf32> -> vector<8x32xf32>
    %c0_15 = arith.constant 0 : index
    %c0_16 = arith.constant 0 : index
    %26 = vector.load %arg7[%c0_15, %c0_16] : memref<1x32xf32, #tpu.memory_space<vmem>>, vector<1x32xf32>
    %27 = vector.broadcast %26 : vector<1x32xf32> to vector<8x32xf32>
    %28 = arith.addf %25, %27 : vector<8x32xf32>
    %29 = math.tanh %28 : vector<8x32xf32>
    %c0_17 = arith.constant 0 : index
    %c0_18 = arith.constant 0 : index
    %30 = vector.load %arg8[%c0_17, %c0_18] : memref<32x32xf32, #tpu.memory_space<vmem>>, vector<32x32xf32>
    %cst_19 = arith.constant dense<0.000000e+00> : vector<8x32xf32>
    %31 = tpu.matmul %29, %30, %cst_19 {dimension_numbers = #tpu.dot_dimension_numbers<[1], [0], [0], [1], [0, 0, 1, 1], [], []>} : vector<8x32xf32>, vector<32x32xf32>, vector<8x32xf32> -> vector<8x32xf32>
    %c0_20 = arith.constant 0 : index
    %c0_21 = arith.constant 0 : index
    %32 = vector.load %arg9[%c0_20, %c0_21] : memref<1x32xf32, #tpu.memory_space<vmem>>, vector<1x32xf32>
    %33 = vector.broadcast %32 : vector<1x32xf32> to vector<8x32xf32>
    %34 = arith.addf %31, %33 : vector<8x32xf32>
    %35 = math.tanh %34 : vector<8x32xf32>
    %c0_22 = arith.constant 0 : index
    %c0_23 = arith.constant 0 : index
    %36 = vector.load %arg10[%c0_22, %c0_23] : memref<32x64xf32, #tpu.memory_space<vmem>>, vector<32x64xf32>
    %cst_24 = arith.constant dense<0.000000e+00> : vector<8x64xf32>
    %37 = tpu.matmul %35, %36, %cst_24 {dimension_numbers = #tpu.dot_dimension_numbers<[1], [0], [0], [1], [0, 0, 1, 1], [], []>} : vector<8x32xf32>, vector<32x64xf32>, vector<8x64xf32> -> vector<8x64xf32>
    %c0_25 = arith.constant 0 : index
    %c0_26 = arith.constant 0 : index
    %38 = vector.load %arg11[%c0_25, %c0_26] : memref<1x64xf32, #tpu.memory_space<vmem>>, vector<1x64xf32>
    %39 = vector.broadcast %38 : vector<1x64xf32> to vector<8x64xf32>
    %40 = arith.addf %37, %39 : vector<8x64xf32>
    %41 = math.tanh %40 : vector<8x64xf32>
    %c0_27 = arith.constant 0 : index
    %c0_28 = arith.constant 0 : index
    %42 = vector.load %arg12[%c0_27, %c0_28] : memref<64x27xf32, #tpu.memory_space<vmem>>, vector<64x27xf32>
    %cst_29 = arith.constant dense<0.000000e+00> : vector<8x27xf32>
    %43 = tpu.matmul %41, %42, %cst_29 {dimension_numbers = #tpu.dot_dimension_numbers<[1], [0], [0], [1], [0, 0, 1, 1], [], []>} : vector<8x64xf32>, vector<64x27xf32>, vector<8x27xf32> -> vector<8x27xf32>
    %c0_30 = arith.constant 0 : index
    %c0_31 = arith.constant 0 : index
    %44 = vector.load %arg13[%c0_30, %c0_31] : memref<1x27xf32, #tpu.memory_space<vmem>>, vector<1x27xf32>
    %45 = vector.broadcast %44 : vector<1x27xf32> to vector<8x27xf32>
    %46 = arith.addf %43, %45 : vector<8x27xf32>
    %c0_32 = arith.constant 0 : index
    %c0_33 = arith.constant 0 : index
    %47 = vector.load %arg14[%c0_32, %c0_33] : memref<8x27xf32, #tpu.memory_space<vmem>>, vector<8x27xf32>
    tpu.vector_store %arg14[%c0_32, %c0_33], %46 {strides = array<i32>} : memref<8x27xf32, #tpu.memory_space<vmem>>, vector<8x27xf32>,
    return
  }
  func.func @transform_0(%arg0: i32) -> (i32, i32) {
    %c0_i32 = arith.constant 0 : i32
    %c0_i32_0 = arith.constant 0 : i32
    return %arg0, %c0_i32 : i32, i32
  }
  func.func @transform_1(%arg0: i32) -> (i32, i32) {
    %c0_i32 = arith.constant 0 : i32
    %c0_i32_0 = arith.constant 0 : i32
    return %arg0, %c0_i32 : i32, i32
  }
  func.func @transform_2(%arg0: i32) -> (i32, i32) {
    %c0_i32 = arith.constant 0 : i32
    %c0_i32_0 = arith.constant 0 : i32
    %c0_i32_1 = arith.constant 0 : i32
    return %c0_i32, %c0_i32_0 : i32, i32
  }
  func.func @transform_3(%arg0: i32) -> (i32, i32) {
    %c0_i32 = arith.constant 0 : i32
    %c0_i32_0 = arith.constant 0 : i32
    %c0_i32_1 = arith.constant 0 : i32
    return %c0_i32, %c0_i32_0 : i32, i32
  }
  func.func @transform_4(%arg0: i32) -> (i32, i32) {
    %c0_i32 = arith.constant 0 : i32
    %c0_i32_0 = arith.constant 0 : i32
    %c0_i32_1 = arith.constant 0 : i32
    return %c0_i32, %c0_i32_0 : i32, i32
  }
  func.func @transform_5(%arg0: i32) -> (i32, i32) {
    %c0_i32 = arith.constant 0 : i32
    %c0_i32_0 = arith.constant 0 : i32
    %c0_i32_1 = arith.constant 0 : i32
    return %c0_i32, %c0_i32_0 : i32, i32
  }
  func.func @transform_6(%arg0: i32) -> (i32, i32) {
    %c0_i32 = arith.constant 0 : i32
    %c0_i32_0 = arith.constant 0 : i32
    %c0_i32_1 = arith.constant 0 : i32
    return %c0_i32, %c0_i32_0 : i32, i32
  }
  func.func @transform_7(%arg0: i32) -> (i32, i32) {
    %c0_i32 = arith.constant 0 : i32
    %c0_i32_0 = arith.constant 0 : i32
    %c0_i32_1 = arith.constant 0 : i32
    return %c0_i32, %c0_i32_0 : i32, i32
  }
  func.func @transform_8(%arg0: i32) -> (i32, i32) {
    %c0_i32 = arith.constant 0 : i32
    %c0_i32_0 = arith.constant 0 : i32
    %c0_i32_1 = arith.constant 0 : i32
    return %c0_i32, %c0_i32_0 : i32, i32
  }
  func.func @transform_9(%arg0: i32) -> (i32, i32) {
    %c0_i32 = arith.constant 0 : i32
    %c0_i32_0 = arith.constant 0 : i32
    %c0_i32_1 = arith.constant 0 : i32
    return %c0_i32, %c0_i32_0 : i32, i32
  }
  func.func @transform_10(%arg0: i32) -> (i32, i32) {
    %c0_i32 = arith.constant 0 : i32
    %c0_i32_0 = arith.constant 0 : i32
    %c0_i32_1 = arith.constant 0 : i32
    return %c0_i32, %c0_i32_0 : i32, i32
  }
  func.func @transform_11(%arg0: i32) -> (i32, i32) {
    %c0_i32 = arith.constant 0 : i32
    %c0_i32_0 = arith.constant 0 : i32
    %c0_i32_1 = arith.constant 0 : i32
    return %c0_i32, %c0_i32_0 : i32, i32
  }
  func.func @transform_12(%arg0: i32) -> (i32, i32) {
    %c0_i32 = arith.constant 0 : i32
    %c0_i32_0 = arith.constant 0 : i32
    %c0_i32_1 = arith.constant 0 : i32
    return %c0_i32, %c0_i32_0 : i32, i32
  }
  func.func @transform_13(%arg0: i32) -> (i32, i32) {
    %c0_i32 = arith.constant 0 : i32
    %c0_i32_0 = arith.constant 0 : i32
    return %arg0, %c0_i32 : i32, i32
  }
}

</mosaic_0001>

<llo_original>
// kernel: tpu_custom_call.1
$region0: #{tpu_custom_call.1}
  #allocation0 [shape = 'u32[]', space=smem, size = 0x4, offset = 0x4, fixed_abs, tag = 'smem constant byte address 0x4 - core index']
  #allocation1 [shape = 'u32[144,128]{1,0:T(1,128)}', space=vmem, size = 0x12000, scoped, tag = 'internal scratch']
  %s0 = inlined_call_operand.vmem [shape: s32[24,3], index: 0, kind: input, shape index: {}]
  %s1 = inlined_call_operand.vmem [shape: f32[24,6], index: 1, kind: input, shape index: {}]
  %s2 = inlined_call_operand.vmem [shape: f32[21,64], index: 2, kind: input, shape index: {}]
  %s3 = inlined_call_operand.vmem [shape: f32[6,64], index: 3, kind: input, shape index: {}]
  %s4 = inlined_call_operand.vmem [shape: f32[1,64], index: 4, kind: input, shape index: {}]
  %s5 = inlined_call_operand.vmem [shape: f32[64,32], index: 5, kind: input, shape index: {}]
  %s6 = inlined_call_operand.vmem [shape: f32[1,32], index: 6, kind: input, shape index: {}]
  %s7 = inlined_call_operand.vmem [shape: f32[32,32], index: 7, kind: input, shape index: {}]
  %s8 = inlined_call_operand.vmem [shape: f32[1,32], index: 8, kind: input, shape index: {}]
  %s9 = inlined_call_operand.vmem [shape: f32[32,64], index: 9, kind: input, shape index: {}]
  %s10 = inlined_call_operand.vmem [shape: f32[1,64], index: 10, kind: input, shape index: {}]
  %s11 = inlined_call_operand.vmem [shape: f32[64,27], index: 11, kind: input, shape index: {}]
  %s12 = inlined_call_operand.vmem [shape: f32[1,27], index: 12, kind: input, shape index: {}]
  %s13 = inlined_call_operand.hbm [shape: f32[24,27], index: 13, kind: output, shape index: {}]
  %s14 = sld [smem:[#allocation0]]
  $region85: #{tpu_custom_call.1} parent=0
    _
  %s16 = ssub.s32 1, %s14
  %s17 = scalar_select 0, %s16, %s14
  $region1: #{tpu_custom_call.1} parent=0
    #allocation2 [shape = 'u8[8192]{0}', space=vmem, size = 0x2000, scoped, tag = 'output window, operand 0']
    #allocation3 [shape = 's32[2]{0}', space=sflag, size = 0x8, scoped, tag = 'scoped memory for tpu_custom_call.1']
    %18 = vsyncpa [#allocation3], 0
    %s19 = scalar_lea.sflag [#allocation3], 1
    %20 = vsyncpa %s19, 0
    loop: start=0, step=1, limit=5
    $region2: #{tpu_custom_call.1} parent=1 // loop_pre_header
      _
    $region3: #{tpu_custom_call.1} parent=1 // loop_header
      %s22 = sphi 0, %s26
      %p23 = scmp.ge.s32.totalorder %s22, 5
      %s32 = sphi 0, %s34
      %s35 = sphi 0, %s32
      %s36 = sphi 0, %s35
      %s52 = sphi 0, %s36
      %s58 = sphi 0, %s60
      %s61 = sphi 0, %s58
      %s62 = sphi 0, %s61
      %s78 = sphi 0, %s62
      %s82 = sphi 0, %s82
      %s84 = sphi 0, %s82
      %s85 = sphi 0, %s84
      %s99 = sphi 0, %s85
      %s103 = sphi 0, %s103
      %s105 = sphi 0, %s103
      %s106 = sphi 0, %s105
      %s120 = sphi 0, %s106
      %s124 = sphi 0, %s124
      %s126 = sphi 0, %s124
      %s127 = sphi 0, %s126
      %s141 = sphi 0, %s127
      %s145 = sphi 0, %s145
      %s147 = sphi 0, %s145
      %s148 = sphi 0, %s147
      %s162 = sphi 0, %s148
      %s166 = sphi 0, %s166
      %s168 = sphi 0, %s166
      %s169 = sphi 0, %s168
      %s183 = sphi 0, %s169
      %s187 = sphi 0, %s187
      %s189 = sphi 0, %s187
      %s190 = sphi 0, %s189
      %s204 = sphi 0, %s190
      %s208 = sphi 0, %s208
      %s210 = sphi 0, %s208
      %s211 = sphi 0, %s210
      %s225 = sphi 0, %s211
      %s229 = sphi 0, %s229
      %s231 = sphi 0, %s229
      %s232 = sphi 0, %s231
      %s246 = sphi 0, %s232
      %s250 = sphi 0, %s250
      %s252 = sphi 0, %s250
      %s253 = sphi 0, %s252
      %s267 = sphi 0, %s253
      %s271 = sphi 0, %s271
      %s273 = sphi 0, %s271
      %s274 = sphi 0, %s273
      %s288 = sphi 0, %s274
      %s292 = sphi 0, %s292
      %s294 = sphi 0, %s292
      %s295 = sphi 0, %s294
      %s309 = sphi 0, %s295
      %s315 = sphi 0, %s317
      %s318 = sphi 0, %s315
      %s319 = sphi 0, %s318
      %s335 = sphi 0, %s319
    $region4: #{tpu_custom_call.1} parent=1 // loop_header_branch
      %25 = sbr.rel (%p23) target = $region8
    $region5: #{tpu_custom_call.1} parent=1 // loop_body
      %s27 = ssub.s32 %s22, 1
      %s28 = ssub.s32 %s22, 2
      %s29 = sadd.s32 %s22, 1
      %s30 = ssub.s32 %s22, %s29
      %p31 = scmp.eq.s32.totalorder %s30, 0
      %s33 = sadd.s32 %s32, 1
      %s34 = scalar_select %p31, %s32, %s33
      %p37 = pneg %p31
      %p38 = scmp.eq.s32.totalorder %s22, 2
      %p39 = por %p37, %p38
      %p40 = scmp.ne.s32.totalorder %s32, %s35
      %p41 = scmp.eq.s32.totalorder %s22, 0
      %p42 = por %p40, %p41
      %p43 = scmp.ne.s32.totalorder %s32, %s35
      %p44 = scmp.eq.s32.totalorder %s27, 2
      %p45 = por %p43, %p44
      %p46 = scmp.ne.s32.totalorder %s35, %s36
      %p47 = scmp.eq.s32.totalorder %s27, 0
      %p48 = por %p46, %p47
      %p49 = scmp.ne.s32.totalorder %s35, %s36
      %p50 = scmp.eq.s32.totalorder %s28, 2
      %p51 = por %p49, %p50
      %p53 = scmp.ne.s32.totalorder %s36, %s52
      %p54 = scmp.eq.s32.totalorder %s28, 0
      %p55 = por %p53, %p54
      %s56 = ssub.s32 %s22, %s29
      %p57 = scmp.eq.s32.totalorder %s56, 0
      %s59 = sadd.s32 %s58, 1
      %s60 = scalar_select %p57, %s58, %s59
      %p63 = pneg %p57
      %p64 = scmp.eq.s32.totalorder %s22, 2
      %p65 = por %p63, %p64
      %p66 = scmp.ne.s32.totalorder %s58, %s61
      %p67 = scmp.eq.s32.totalorder %s22, 0
      %p68 = por %p66, %p67
      %p69 = scmp.ne.s32.totalorder %s58, %s61
      %p70 = scmp.eq.s32.totalorder %s27, 2
      %p71 = por %p69, %p70
      %p72 = scmp.ne.s32.totalorder %s61, %s62
      %p73 = scmp.eq.s32.totalorder %s27, 0
      %p74 = por %p72, %p73
      %p75 = scmp.ne.s32.totalorder %s61, %s62
      %p76 = scmp.eq.s32.totalorder %s28, 2
      %p77 = por %p75, %p76
      %p79 = scmp.ne.s32.totalorder %s62, %s78
      %p80 = scmp.eq.s32.totalorder %s28, 0
      %p81 = por %p79, %p80
      %s83 = sadd.s32 %s82, 1
      %p86 = scmp.eq.s32.totalorder %s22, 2
      %p87 = scmp.ne.s32.totalorder %s82, %s84
      %p88 = scmp.eq.s32.totalorder %s22, 0
      %p89 = por %p87, %p88
      %p90 = scmp.ne.s32.totalorder %s82, %s84
      %p91 = scmp.eq.s32.totalorder %s27, 2
      %p92 = por %p90, %p91
      %p93 = scmp.ne.s32.totalorder %s84, %s85
      %p94 = scmp.eq.s32.totalorder %s27, 0
      %p95 = por %p93, %p94
      %p96 = scmp.ne.s32.totalorder %s84, %s85
      %p97 = scmp.eq.s32.totalorder %s28, 2
      %p98 = por %p96, %p97
      %p100 = scmp.ne.s32.totalorder %s85, %s99
      %p101 = scmp.eq.s32.totalorder %s28, 0
      %p102 = por %p100, %p101
      %s104 = sadd.s32 %s103, 1
      %p107 = scmp.eq.s32.totalorder %s22, 2
      %p108 = scmp.ne.s32.totalorder %s103, %s105
      %p109 = scmp.eq.s32.totalorder %s22, 0
      %p110 = por %p108, %p109
      %p111 = scmp.ne.s32.totalorder %s103, %s105
      %p112 = scmp.eq.s32.totalorder %s27, 2
      %p113 = por %p111, %p112
      %p114 = scmp.ne.s32.totalorder %s105, %s106
      %p115 = scmp.eq.s32.totalorder %s27, 0
      %p116 = por %p114, %p115
      %p117 = scmp.ne.s32.totalorder %s105, %s106
      %p118 = scmp.eq.s32.totalorder %s28, 2
      %p119 = por %p117, %p118
      %p121 = scmp.ne.s32.totalorder %s106, %s120
      %p122 = scmp.eq.s32.totalorder %s28, 0
      %p123 = por %p121, %p122
      %s125 = sadd.s32 %s124, 1
      %p128 = scmp.eq.s32.totalorder %s22, 2
      %p129 = scmp.ne.s32.totalorder %s124, %s126
      %p130 = scmp.eq.s32.totalorder %s22, 0
      %p131 = por %p129, %p130
      %p132 = scmp.ne.s32.totalorder %s124, %s126
      %p133 = scmp.eq.s32.totalorder %s27, 2
      %p134 = por %p132, %p133
      %p135 = scmp.ne.s32.totalorder %s126, %s127
      %p136 = scmp.eq.s32.totalorder %s27, 0
      %p137 = por %p135, %p136
      %p138 = scmp.ne.s32.totalorder %s126, %s127
      %p139 = scmp.eq.s32.totalorder %s28, 2
      %p140 = por %p138, %p139
      %p142 = scmp.ne.s32.totalorder %s127, %s141
      %p143 = scmp.eq.s32.totalorder %s28, 0
      %p144 = por %p142, %p143
      %s146 = sadd.s32 %s145, 1
      %p149 = scmp.eq.s32.totalorder %s22, 2
      %p150 = scmp.ne.s32.totalorder %s145, %s147
      %p151 = scmp.eq.s32.totalorder %s22, 0
      %p152 = por %p150, %p151
      %p153 = scmp.ne.s32.totalorder %s145, %s147
      %p154 = scmp.eq.s32.totalorder %s27, 2
      %p155 = por %p153, %p154
      %p156 = scmp.ne.s32.totalorder %s147, %s148
      %p157 = scmp.eq.s32.totalorder %s27, 0
      %p158 = por %p156, %p157
      %p159 = scmp.ne.s32.totalorder %s147, %s148
      %p160 = scmp.eq.s32.totalorder %s28, 2
      %p161 = por %p159, %p160
      %p163 = scmp.ne.s32.totalorder %s148, %s162
      %p164 = scmp.eq.s32.totalorder %s28, 0
      %p165 = por %p163, %p164
      %s167 = sadd.s32 %s166, 1
      %p170 = scmp.eq.s32.totalorder %s22, 2
      %p171 = scmp.ne.s32.totalorder %s166, %s168
      %p172 = scmp.eq.s32.totalorder %s22, 0
      %p173 = por %p171, %p172
      %p174 = scmp.ne.s32.totalorder %s166, %s168
      %p175 = scmp.eq.s32.totalorder %s27, 2
      %p176 = por %p174, %p175
      %p177 = scmp.ne.s32.totalorder %s168, %s169
      %p178 = scmp.eq.s32.totalorder %s27, 0
      %p179 = por %p177, %p178
      %p180 = scmp.ne.s32.totalorder %s168, %s169
      %p181 = scmp.eq.s32.totalorder %s28, 2
      %p182 = por %p180, %p181
      %p184 = scmp.ne.s32.totalorder %s169, %s183
      %p185 = scmp.eq.s32.totalorder %s28, 0
      %p186 = por %p184, %p185
      %s188 = sadd.s32 %s187, 1
      %p191 = scmp.eq.s32.totalorder %s22, 2
      %p192 = scmp.ne.s32.totalorder %s187, %s189
      %p193 = scmp.eq.s32.totalorder %s22, 0
      %p194 = por %p192, %p193
      %p195 = scmp.ne.s32.totalorder %s187, %s189
      %p196 = scmp.eq.s32.totalorder %s27, 2
      %p197 = por %p195, %p196
      %p198 = scmp.ne.s32.totalorder %s189, %s190
      %p199 = scmp.eq.s32.totalorder %s27, 0
      %p200 = por %p198, %p199
      %p201 = scmp.ne.s32.totalorder %s189, %s190
      %p202 = scmp.eq.s32.totalorder %s28, 2
      %p203 = por %p201, %p202
      %p205 = scmp.ne.s32.totalorder %s190, %s204
      %p206 = scmp.eq.s32.totalorder %s28, 0
      %p207 = por %p205, %p206
      %s209 = sadd.s32 %s208, 1
      %p212 = scmp.eq.s32.totalorder %s22, 2
      %p213 = scmp.ne.s32.totalorder %s208, %s210
      %p214 = scmp.eq.s32.totalorder %s22, 0
      %p215 = por %p213, %p214
      %p216 = scmp.ne.s32.totalorder %s208, %s210
      %p217 = scmp.eq.s32.totalorder %s27, 2
      %p218 = por %p216, %p217
      %p219 = scmp.ne.s32.totalorder %s210, %s211
      %p220 = scmp.eq.s32.totalorder %s27, 0
      %p221 = por %p219, %p220
      %p222 = scmp.ne.s32.totalorder %s210, %s211
      %p223 = scmp.eq.s32.totalorder %s28, 2
      %p224 = por %p222, %p223
      %p226 = scmp.ne.s32.totalorder %s211, %s225
      %p227 = scmp.eq.s32.totalorder %s28, 0
      %p228 = por %p226, %p227
      %s230 = sadd.s32 %s229, 1
      %p233 = scmp.eq.s32.totalorder %s22, 2
      %p234 = scmp.ne.s32.totalorder %s229, %s231
      %p235 = scmp.eq.s32.totalorder %s22, 0
      %p236 = por %p234, %p235
      %p237 = scmp.ne.s32.totalorder %s229, %s231
      %p238 = scmp.eq.s32.totalorder %s27, 2
      %p239 = por %p237, %p238
      %p240 = scmp.ne.s32.totalorder %s231, %s232
      %p241 = scmp.eq.s32.totalorder %s27, 0
      %p242 = por %p240, %p241
      %p243 = scmp.ne.s32.totalorder %s231, %s232
      %p244 = scmp.eq.s32.totalorder %s28, 2
      %p245 = por %p243, %p244
      %p247 = scmp.ne.s32.totalorder %s232, %s246
      %p248 = scmp.eq.s32.totalorder %s28, 0
      %p249 = por %p247, %p248
      %s251 = sadd.s32 %s250, 1
      %p254 = scmp.eq.s32.totalorder %s22, 2
      %p255 = scmp.ne.s32.totalorder %s250, %s252
      %p256 = scmp.eq.s32.totalorder %s22, 0
      %p257 = por %p255, %p256
      %p258 = scmp.ne.s32.totalorder %s250, %s252
      %p259 = scmp.eq.s32.totalorder %s27, 2
      %p260 = por %p258, %p259
      %p261 = scmp.ne.s32.totalorder %s252, %s253
      %p262 = scmp.eq.s32.totalorder %s27, 0
      %p263 = por %p261, %p262
      %p264 = scmp.ne.s32.totalorder %s252, %s253
      %p265 = scmp.eq.s32.totalorder %s28, 2
      %p266 = por %p264, %p265
      %p268 = scmp.ne.s32.totalorder %s253, %s267
      %p269 = scmp.eq.s32.totalorder %s28, 0
      %p270 = por %p268, %p269
      %s272 = sadd.s32 %s271, 1
      %p275 = scmp.eq.s32.totalorder %s22, 2
      %p276 = scmp.ne.s32.totalorder %s271, %s273
      %p277 = scmp.eq.s32.totalorder %s22, 0
      %p278 = por %p276, %p277
      %p279 = scmp.ne.s32.totalorder %s271, %s273
      %p280 = scmp.eq.s32.totalorder %s27, 2
      %p281 = por %p279, %p280
      %p282 = scmp.ne.s32.totalorder %s273, %s274
      %p283 = scmp.eq.s32.totalorder %s27, 0
      %p284 = por %p282, %p283
      %p285 = scmp.ne.s32.totalorder %s273, %s274
      %p286 = scmp.eq.s32.totalorder %s28, 2
      %p287 = por %p285, %p286
      %p289 = scmp.ne.s32.totalorder %s274, %s288
      %p290 = scmp.eq.s32.totalorder %s28, 0
      %p291 = por %p289, %p290
      %s293 = sadd.s32 %s292, 1
      %p296 = scmp.eq.s32.totalorder %s22, 2
      %p297 = scmp.ne.s32.totalorder %s292, %s294
      %p298 = scmp.eq.s32.totalorder %s22, 0
      %p299 = por %p297, %p298
      %p300 = scmp.ne.s32.totalorder %s292, %s294
      %p301 = scmp.eq.s32.totalorder %s27, 2
      %p302 = por %p300, %p301
      %p303 = scmp.ne.s32.totalorder %s294, %s295
      %p304 = scmp.eq.s32.totalorder %s27, 0
      %p305 = por %p303, %p304
      %p306 = scmp.ne.s32.totalorder %s294, %s295
      %p307 = scmp.eq.s32.totalorder %s28, 2
      %p308 = por %p306, %p307
      %p310 = scmp.ne.s32.totalorder %s295, %s309
      %p311 = scmp.eq.s32.totalorder %s28, 0
      %p312 = por %p310, %p311
      %s313 = ssub.s32 %s22, %s29
      %p314 = scmp.eq.s32.totalorder %s313, 0
      %s316 = sadd.s32 %s315, 1
      %s317 = scalar_select %p314, %s315, %s316
      %p320 = pneg %p314
      %p321 = scmp.eq.s32.totalorder %s22, 2
      %p322 = por %p320, %p321
      %p323 = scmp.ne.s32.totalorder %s315, %s318
      %p324 = scmp.eq.s32.totalorder %s22, 0
      %p325 = por %p323, %p324
      %p326 = scmp.ne.s32.totalorder %s315, %s318
      %p327 = scmp.eq.s32.totalorder %s27, 2
      %p328 = por %p326, %p327
      %p329 = scmp.ne.s32.totalorder %s318, %s319
      %p330 = scmp.eq.s32.totalorder %s27, 0
      %p331 = por %p329, %p330
      %p332 = scmp.ne.s32.totalorder %s318, %s319
      %p333 = scmp.eq.s32.totalorder %s28, 2
      %p334 = por %p332, %p333
      %p336 = scmp.ne.s32.totalorder %s319, %s335
      %p337 = scmp.eq.s32.totalorder %s28, 0
      %p338 = por %p336, %p337
      %p339 = scmp.le.s32.totalorder 1, %s22
      %p340 = scmp.lt.s32.totalorder %s22, 4
      %p341 = pnand %p339, %p340
      %p342 = pneg %p341
      // Predicated region
      $region9: #{tpu_custom_call.1} parent=5 // pred_check
        _
      $region10: #{tpu_custom_call.1} parent=5 // pred_check_branch
        %344 = sbr.rel (%p341) target = $region12
      $region11: #{tpu_custom_call.1} parent=5 // pred_region
        %s345 = ssub.s32 %s22, 1
        // Predicated region
        $region13: #{tpu_custom_call.1} parent=11 // pred_check
          %p346 = pneg %p95
        $region14: #{tpu_custom_call.1} parent=11 // pred_check_branch
          %348 = sbr.rel (%p346) target = $region16
        $region15: #{tpu_custom_call.1} parent=11 // pred_region
          _
        $region16: #{tpu_custom_call.1} parent=11 // pred_fallthru
          _
        // Predicated region
        $region17: #{tpu_custom_call.1} parent=11 // pred_check
          %p349 = pneg %p116
        $region18: #{tpu_custom_call.1} parent=11 // pred_check_branch
          %351 = sbr.rel (%p349) target = $region20
        $region19: #{tpu_custom_call.1} parent=11 // pred_region
          _
        $region20: #{tpu_custom_call.1} parent=11 // pred_fallthru
          _
        // Predicated region
        $region21: #{tpu_custom_call.1} parent=11 // pred_check
          %p352 = pneg %p137
        $region22: #{tpu_custom_call.1} parent=11 // pred_check_branch
          %354 = sbr.rel (%p352) target = $region24
        $region23: #{tpu_custom_call.1} parent=11 // pred_region
          _
        $region24: #{tpu_custom_call.1} parent=11 // pred_fallthru
          _
        // Predicated region
        $region25: #{tpu_custom_call.1} parent=11 // pred_check
          %p355 = pneg %p158
        $region26: #{tpu_custom_call.1} parent=11 // pred_check_branch
          %357 = sbr.rel (%p355) target = $region28
        $region27: #{tpu_custom_call.1} parent=11 // pred_region
          _
        $region28: #{tpu_custom_call.1} parent=11 // pred_fallthru
          _
        // Predicated region
        $region29: #{tpu_custom_call.1} parent=11 // pred_check
          %p358 = pneg %p179
        $region30: #{tpu_custom_call.1} parent=11 // pred_check_branch
          %360 = sbr.rel (%p358) target = $region32
        $region31: #{tpu_custom_call.1} parent=11 // pred_region
          _
        $region32: #{tpu_custom_call.1} parent=11 // pred_fallthru
          _
        // Predicated region
        $region33: #{tpu_custom_call.1} parent=11 // pred_check
          %p361 = pneg %p200
        $region34: #{tpu_custom_call.1} parent=11 // pred_check_branch
          %363 = sbr.rel (%p361) target = $region36
        $region35: #{tpu_custom_call.1} parent=11 // pred_region
          _
        $region36: #{tpu_custom_call.1} parent=11 // pred_fallthru
          _
        // Predicated region
        $region37: #{tpu_custom_call.1} parent=11 // pred_check
          %p364 = pneg %p221
        $region38: #{tpu_custom_call.1} parent=11 // pred_check_branch
          %366 = sbr.rel (%p364) target = $region40
        $region39: #{tpu_custom_call.1} parent=11 // pred_region
          _
        $region40: #{tpu_custom_call.1} parent=11 // pred_fallthru
          _
        // Predicated region
        $region41: #{tpu_custom_call.1} parent=11 // pred_check
          %p367 = pneg %p242
        $region42: #{tpu_custom_call.1} parent=11 // pred_check_branch
          %369 = sbr.rel (%p367) target = $region44
        $region43: #{tpu_custom_call.1} parent=11 // pred_region
          _
        $region44: #{tpu_custom_call.1} parent=11 // pred_fallthru
          _
        // Predicated region
        $region45: #{tpu_custom_call.1} parent=11 // pred_check
          %p370 = pneg %p263
        $region46: #{tpu_custom_call.1} parent=11 // pred_check_branch
          %372 = sbr.rel (%p370) target = $region48
        $region47: #{tpu_custom_call.1} parent=11 // pred_region
          _
        $region48: #{tpu_custom_call.1} parent=11 // pred_fallthru
          _
        // Predicated region
        $region49: #{tpu_custom_call.1} parent=11 // pred_check
          %p373 = pneg %p284
        $region50: #{tpu_custom_call.1} parent=11 // pred_check_branch
          %375 = sbr.rel (%p373) target = $region52
        $region51: #{tpu_custom_call.1} parent=11 // pred_region
          _
        $region52: #{tpu_custom_call.1} parent=11 // pred_fallthru
          _
        // Predicated region
        $region53: #{tpu_custom_call.1} parent=11 // pred_check
          %p376 = pneg %p305
        $region54: #{tpu_custom_call.1} parent=11 // pred_check_branch
          %378 = sbr.rel (%p376) target = $region56
        $region55: #{tpu_custom_call.1} parent=11 // pred_region
          _
        $region56: #{tpu_custom_call.1} parent=11 // pred_fallthru
          _
      $region12: #{tpu_custom_call.1} parent=5 // pred_fallthru
        _
      %p379 = scmp.lt.s32.totalorder %s22, 3
      // Predicated region
      $region57: #{tpu_custom_call.1} parent=5 // pred_check
        %p380 = pneg %p379
      $region58: #{tpu_custom_call.1} parent=5 // pred_check_branch
        %382 = sbr.rel (%p380) target = $region60
      $region59: #{tpu_custom_call.1} parent=5 // pred_region
        // Predicated region
        $region61: #{tpu_custom_call.1} parent=59 // pred_check
          %p383 = pneg %p42
        $region62: #{tpu_custom_call.1} parent=59 // pred_check_branch
          %385 = sbr.rel (%p383) target = $region64
        $region63: #{tpu_custom_call.1} parent=59 // pred_region
          %p386 = scmp.lt.s32.totalorder %s22, 2
          %s387 = scalar_select %p386, %s22, 2
          %s388 = smul.addr %s387, 8
          %s389 = scalar_lea.vmem %s0, %s388
        $region64: #{tpu_custom_call.1} parent=59 // pred_fallthru
          _
        // Predicated region
        $region65: #{tpu_custom_call.1} parent=59 // pred_check
          %p390 = pneg %p68
        $region66: #{tpu_custom_call.1} parent=59 // pred_check_branch
          %392 = sbr.rel (%p390) target = $region68
        $region67: #{tpu_custom_call.1} parent=59 // pred_region
          %p393 = scmp.lt.s32.totalorder %s22, 2
          %s394 = scalar_select %p393, %s22, 2
          %s395 = smul.addr %s394, 8
          %s396 = scalar_lea.vmem %s1, %s395
        $region68: #{tpu_custom_call.1} parent=59 // pred_fallthru
          _
      $region60: #{tpu_custom_call.1} parent=5 // pred_fallthru
        _
      %p397 = scmp.le.s32.totalorder 1, %s22
      %p398 = scmp.lt.s32.totalorder %s22, 4
      %p399 = pnand %p397, %p398
      %p400 = pneg %p399
      // Predicated region
      $region69: #{tpu_custom_call.1} parent=5 // pred_check
        _
      $region70: #{tpu_custom_call.1} parent=5 // pred_check_branch
        %402 = sbr.rel (%p399) target = $region72
      $region71: #{tpu_custom_call.1} parent=5 // pred_region
        %s403 = ssub.s32 %s22, 1
        %p404 = scmp.lt.s32.totalorder %s27, 2
        %s405 = scalar_select %p404, %s27, 2
        %s406 = smul.addr %s405, 8
        %s407 = scalar_lea.vmem %s0, %s406
        %p408 = pneg %p48
        %p409 = pneg %p45
        %p410 = scmp.lt.s32.totalorder %s27, 2
        %s411 = scalar_select %p410, %s27, 2
        %s412 = smul.addr %s411, 8
        %s413 = scalar_lea.vmem %s1, %s412
        %p414 = pneg %p74
        %p415 = pneg %p71
        %p416 = pneg %p95
        %p417 = pneg %p92
        %p418 = pneg %p116
        %p419 = pneg %p113
        %p420 = pneg %p137
        %p421 = pneg %p134
        %p422 = pneg %p158
        %p423 = pneg %p155
        %p424 = pneg %p179
        %p425 = pneg %p176
        %p426 = pneg %p200
        %p427 = pneg %p197
        %p428 = pneg %p221
        %p429 = pneg %p218
        %p430 = pneg %p242
        %p431 = pneg %p239
        %p432 = pneg %p263
        %p433 = pneg %p260
        %p434 = pneg %p284
        %p435 = pneg %p281
        %p436 = pneg %p305
        %p437 = pneg %p302
        %p438 = pneg %p331
        %p439 = pneg %p328
        %s440 = sand.u32 %s318, 1
        %s441 = scalar_lea.sflag [#allocation3], %s440
        %s442 = sand.u32 %s318, 1
        %s443 = smul.addr %s442, 8
        %s444 = scalar_lea.vmem [#allocation2], %s443
        %p445 = scmp.lt.s32.totalorder %s27, 2
        %s446 = scalar_select %p445, %s27, 2
        %s447 = smul.addr %s446, 8
        %s448 = scalar_lea.vmem %s0, %s447
        %p449 = scmp.lt.s32.totalorder %s27, 2
        %s450 = scalar_select %p449, %s27, 2
        %s451 = smul.addr %s450, 8
        %s452 = scalar_lea.vmem %s1, %s451
        %v453 = vlaneseq
        %v454 = vand.u32 %v453, 127
        %v455 = vld [vmem:[%s448] sm:$0xff]
        %456 = vset.pattern.permute.xlu0 0
        %457 = vperm.xlu0 %456, %v455
        %v458 = vpop.permute.xlu0 %457
        %vm459 = vcmp.eq.s32.totalorder %v454, %v458
        %460 = vset.pattern.permute.xlu0 1
        %461 = vperm.xlu0 %460, %v455
        %v462 = vpop.permute.xlu0 %461
        %vm463 = vcmp.eq.s32.totalorder %v454, %v462
        %vm464 = vmor %vm459, %vm463
        %465 = vset.pattern.permute.xlu0 2
        %466 = vperm.xlu0 %465, %v455
        %v467 = vpop.permute.xlu0 %466
        %vm468 = vcmp.eq.s32.totalorder %v454, %v467
        %vm469 = vmor %vm464, %vm468
        %v470 = vsel %vm469, 1, 0
        %v471 = vcvt.s32.f32 %v470
        %v472 = vld [vmem:[%s2] sm:$0xff]
        %v473 = vld [vmem:[%s2 + $0x8] sm:$0xff]
        %v474 = vld [vmem:[%s2 + $0x10] sm:$0x1f]
        %v475 = vld [vmem:[%s452] sm:$0xff]
        %v476 = vld [vmem:[%s3] sm:$0x3f]
        %vm477 = vcmask 48128
        %v479 = vsel %vm477, %v475, 0
        %vm481 = vcmask 1045504
        %v483 = vsel %vm481, %v476, 0
        %485 = vmatprep.subr.mxu0 0.0
        %486 = vmatpush1.msra.mxu0 0.0
        %487 = vmatprep.subr.mxu0 0.0
        %488 = vmatpush1.msra.mxu0 0.0
        %489 = vmatprep.subr.mxu0 0.0
        %490 = vmatpush1.msra.mxu0 0.0
        %491 = vmatprep.subr.mxu0 0.0
        %492 = vmatpush1.msra.mxu0 0.0
        %493 = vmatprep.subr.mxu0 0.0
        %494 = vmatpush1.msra.mxu0 0.0
        %495 = vmatprep.subr.mxu0 0.0
        %496 = vmatpush1.msra.mxu0 0.0
        %497 = vmatprep.subr.mxu0 0.0
        %498 = vmatpush1.msra.mxu0 0.0
        %499 = vmatprep.subr.mxu0 0.0
        %500 = vmatpush1.msra.mxu0 0.0
        %501 = vmatprep.subr.mxu0 0.0
        %502 = vmatpush1.msra.mxu0 0.0
        %503 = vmatprep.subr.mxu0 0.0
        %504 = vmatpush1.msra.mxu0 0.0
        %505 = vmatprep.subr.mxu0 0.0
        %506 = vmatpush1.msra.mxu0 0.0
        %507 = vmatprep.subr.mxu0 0.0
        %508 = vmatpush1.msra.mxu0 0.0
        %509 = vmatprep.subr.mxu0 0.0
        %510 = vmatpush1.msra.mxu0 0.0
        %511 = vmatprep.subr.mxu0 0.0
        %512 = vmatpush1.msra.mxu0 0.0
        %513 = vmatprep.subr.mxu0 0.0
        %514 = vmatpush1.msra.mxu0 0.0
        %515 = vmatprep.subr.mxu0 0.0
        %516 = vmatpush1.msra.mxu0 %v483
        %517 = vmatprep.subr.mxu0 0.0
        %518 = vmatpush2.msra.mxu0 0.0
        %519 = vmatprep.subr.mxu0 0.0
        %520 = vmatpush2.msra.mxu0 0.0
        %521 = vmatprep.subr.mxu0 0.0
        %522 = vmatpush2.msra.mxu0 0.0
        %523 = vmatprep.subr.mxu0 0.0
        %524 = vmatpush2.msra.mxu0 0.0
        %525 = vmatprep.subr.mxu0 0.0
        %526 = vmatpush2.msra.mxu0 0.0
        %527 = vmatprep.subr.mxu0 0.0
        %528 = vmatpush2.msra.mxu0 0.0
        %529 = vmatprep.subr.mxu0 0.0
        %530 = vmatpush2.msra.mxu0 0.0
        %531 = vmatprep.subr.mxu0 0.0
        %532 = vmatpush2.msra.mxu0 0.0
        %533 = vmatprep.subr.mxu0 0.0
        %534 = vmatpush2.msra.mxu0 0.0
        %535 = vmatprep.subr.mxu0 0.0
        %536 = vmatpush2.msra.mxu0 0.0
        %537 = vmatprep.subr.mxu0 0.0
        %538 = vmatpush2.msra.mxu0 0.0
        %539 = vmatprep.subr.mxu0 0.0
        %540 = vmatpush2.msra.mxu0 0.0
        %541 = vmatprep.subr.mxu0 0.0
        %542 = vmatpush2.msra.mxu0 0.0
        %543 = vmatprep.subr.mxu0 0.0
        %544 = vmatpush2.msra.mxu0 0.0
        %545 = vmatprep.subr.mxu0 0.0
        %546 = vmatpush2.msra.mxu0 0.0
        %547 = vmatprep.subr.mxu0 0.0
        %548 = vmatpush2.msra.mxu0 0.0
        %549 = vmatprep.mubr.f32.mxu0 0.0
        %550 = vmatmul.mubr.f32.gmra.mxu0 %v479
        %v551 = vpop.f32.mrf.mxu0
        %v552 = vadd.f32 0.0, %v551
        %v553 = vpop.f32.mrf.mxu0
        %554 = vdwg.mxu0
        %vm555 = vcmask 171008
        %v557 = vsel %vm555, %v471, 0
        %vm559 = vcmask 1044480
        %v561 = vsel %vm559, %v474, 0
        %563 = vmatprep.subr.mxu0 0.0
        %564 = vmatpush1.msra.mxu0 0.0
        %565 = vmatprep.subr.mxu0 0.0
        %566 = vmatpush1.msra.mxu0 0.0
        %567 = vmatprep.subr.mxu0 0.0
        %568 = vmatpush1.msra.mxu0 0.0
        %569 = vmatprep.subr.mxu0 0.0
        %570 = vmatpush1.msra.mxu0 0.0
        %571 = vmatprep.subr.mxu0 0.0
        %572 = vmatpush1.msra.mxu0 0.0
        %573 = vmatprep.subr.mxu0 0.0
        %574 = vmatpush1.msra.mxu0 0.0
        %575 = vmatprep.subr.mxu0 0.0
        %576 = vmatpush1.msra.mxu0 0.0
        %577 = vmatprep.subr.mxu0 0.0
        %578 = vmatpush1.msra.mxu0 0.0
        %579 = vmatprep.subr.mxu0 0.0
        %580 = vmatpush1.msra.mxu0 0.0
        %581 = vmatprep.subr.mxu0 0.0
        %582 = vmatpush1.msra.mxu0 0.0
        %583 = vmatprep.subr.mxu0 0.0
        %584 = vmatpush1.msra.mxu0 0.0
        %585 = vmatprep.subr.mxu0 0.0
        %586 = vmatpush1.msra.mxu0 0.0
        %587 = vmatprep.subr.mxu0 0.0
        %588 = vmatpush1.msra.mxu0 0.0
        %589 = vmatprep.subr.mxu0 0.0
        %590 = vmatpush1.msra.mxu0 %v561
        %591 = vmatprep.subr.mxu0 0.0
        %592 = vmatpush1.msra.mxu0 %v473
        %593 = vmatprep.subr.mxu0 0.0
        %594 = vmatpush1.msra.mxu0 %v472
        %595 = vmatprep.subr.mxu0 0.0
        %596 = vmatpush2.msra.mxu0 0.0
        %597 = vmatprep.subr.mxu0 0.0
        %598 = vmatpush2.msra.mxu0 0.0
        %599 = vmatprep.subr.mxu0 0.0
        %600 = vmatpush2.msra.mxu0 0.0
        %601 = vmatprep.subr.mxu0 0.0
        %602 = vmatpush2.msra.mxu0 0.0
        %603 = vmatprep.subr.mxu0 0.0
        %604 = vmatpush2.msra.mxu0 0.0
        %605 = vmatprep.subr.mxu0 0.0
        %606 = vmatpush2.msra.mxu0 0.0
        %607 = vmatprep.subr.mxu0 0.0
        %608 = vmatpush2.msra.mxu0 0.0
        %609 = vmatprep.subr.mxu0 0.0
        %610 = vmatpush2.msra.mxu0 0.0
        %611 = vmatprep.subr.mxu0 0.0
        %612 = vmatpush2.msra.mxu0 0.0
        %613 = vmatprep.subr.mxu0 0.0
        %614 = vmatpush2.msra.mxu0 0.0
        %615 = vmatprep.subr.mxu0 0.0
        %616 = vmatpush2.msra.mxu0 0.0
        %617 = vmatprep.subr.mxu0 0.0
        %618 = vmatpush2.msra.mxu0 0.0
        %619 = vmatprep.subr.mxu0 0.0
        %620 = vmatpush2.msra.mxu0 0.0
        %621 = vmatprep.subr.mxu0 0.0
        %622 = vmatpush2.msra.mxu0 0.0
        %623 = vmatprep.subr.mxu0 0.0
        %624 = vmatpush2.msra.mxu0 0.0
        %625 = vmatprep.subr.mxu0 0.0
        %626 = vmatpush2.msra.mxu0 0.0
        %627 = vmatprep.mubr.f32.mxu0 0.0
        %628 = vmatmul.mubr.f32.gmra.mxu0 %v557
        %v629 = vpop.f32.mrf.mxu0
        %v630 = vadd.f32 %v552, %v629
        %v631 = vpop.f32.mrf.mxu0
        %632 = vdwg.mxu0
        %v633 = vld [vmem:[%s4] sm:$0x1]
        %v635 = vlaneseq
        %v636 = vshrl.u32 %v635, 7
        %v637 = vsub.s32 0, %v636
        %v638 = vrot.slane %v633, %v637
        %v640 = vadd.f32 %v630, %v638
        %v641 = vtanh.pop %v640
        %v642 = vld [vmem:[%s5] sm:$0xff]
        %v643 = vld [vmem:[%s5 + $0x8] sm:$0xff]
        %v644 = vld [vmem:[%s5 + $0x10] sm:$0xff]
        %v645 = vld [vmem:[%s5 + $0x18] sm:$0xff]
        %v646 = vld [vmem:[%s5 + $0x20] sm:$0xff]
        %v647 = vld [vmem:[%s5 + $0x28] sm:$0xff]
        %v648 = vld [vmem:[%s5 + $0x30] sm:$0xff]
        %v649 = vld [vmem:[%s5 + $0x38] sm:$0xff]
        %v650 = vld [vmem:[%s6] sm:$0x1]
        %v652 = vlaneseq
        %v653 = vshrl.u32 %v652, 7
        %v654 = vsub.s32 0, %v653
        %v655 = vrot.slane %v650, %v654
        %vm657 = vcmask 523264
        %v659 = vsel %vm657, %v641, 0
        %661 = vmatprep.subr.mxu0 0.0
        %662 = vmatpush1.msra.mxu0 0.0
        %663 = vmatprep.subr.mxu0 0.0
        %664 = vmatpush1.msra.mxu0 0.0
        %665 = vmatprep.subr.mxu0 0.0
        %666 = vmatpush1.msra.mxu0 0.0
        %667 = vmatprep.subr.mxu0 0.0
        %668 = vmatpush1.msra.mxu0 0.0
        %669 = vmatprep.subr.mxu0 0.0
        %670 = vmatpush1.msra.mxu0 0.0
        %671 = vmatprep.subr.mxu0 0.0
        %672 = vmatpush1.msra.mxu0 0.0
        %673 = vmatprep.subr.mxu0 0.0
        %674 = vmatpush1.msra.mxu0 0.0
        %675 = vmatprep.subr.mxu0 0.0
        %676 = vmatpush1.msra.mxu0 0.0
        %677 = vmatprep.subr.mxu0 0.0
        %678 = vmatpush1.msra.mxu0 %v649
        %679 = vmatprep.subr.mxu0 0.0
        %680 = vmatpush1.msra.mxu0 %v648
        %681 = vmatprep.subr.mxu0 0.0
        %682 = vmatpush1.msra.mxu0 %v647
        %683 = vmatprep.subr.mxu0 0.0
        %684 = vmatpush1.msra.mxu0 %v646
        %685 = vmatprep.subr.mxu0 0.0
        %686 = vmatpush1.msra.mxu0 %v645
        %687 = vmatprep.subr.mxu0 0.0
        %688 = vmatpush1.msra.mxu0 %v644
        %689 = vmatprep.subr.mxu0 0.0
        %690 = vmatpush1.msra.mxu0 %v643
        %691 = vmatprep.subr.mxu0 0.0
        %692 = vmatpush1.msra.mxu0 %v642
        %693 = vmatprep.subr.mxu0 0.0
        %694 = vmatpush2.msra.mxu0 0.0
        %695 = vmatprep.subr.mxu0 0.0
        %696 = vmatpush2.msra.mxu0 0.0
        %697 = vmatprep.subr.mxu0 0.0
        %698 = vmatpush2.msra.mxu0 0.0
        %699 = vmatprep.subr.mxu0 0.0
        %700 = vmatpush2.msra.mxu0 0.0
        %701 = vmatprep.subr.mxu0 0.0
        %702 = vmatpush2.msra.mxu0 0.0
        %703 = vmatprep.subr.mxu0 0.0
        %704 = vmatpush2.msra.mxu0 0.0
        %705 = vmatprep.subr.mxu0 0.0
        %706 = vmatpush2.msra.mxu0 0.0
        %707 = vmatprep.subr.mxu0 0.0
        %708 = vmatpush2.msra.mxu0 0.0
        %709 = vmatprep.subr.mxu0 0.0
        %710 = vmatpush2.msra.mxu0 0.0
        %711 = vmatprep.subr.mxu0 0.0
        %712 = vmatpush2.msra.mxu0 0.0
        %713 = vmatprep.subr.mxu0 0.0
        %714 = vmatpush2.msra.mxu0 0.0
        %715 = vmatprep.subr.mxu0 0.0
        %716 = vmatpush2.msra.mxu0 0.0
        %717 = vmatprep.subr.mxu0 0.0
        %718 = vmatpush2.msra.mxu0 0.0
        %719 = vmatprep.subr.mxu0 0.0
        %720 = vmatpush2.msra.mxu0 0.0
        %721 = vmatprep.subr.mxu0 0.0
        %722 = vmatpush2.msra.mxu0 0.0
        %723 = vmatprep.subr.mxu0 0.0
        %724 = vmatpush2.msra.mxu0 0.0
        %725 = vmatprep.mubr.f32.mxu0 0.0
        %726 = vmatmul.mubr.f32.gmra.mxu0 %v659
        %v727 = vpop.f32.mrf.mxu0
        %v728 = vadd.f32 %v655, %v727
        %v729 = vpop.f32.mrf.mxu0
        %730 = vdwg.mxu0
        %v731 = vtanh.pop %v728
        %v732 = vld [vmem:[%s7] sm:$0xff]
        %v733 = vld [vmem:[%s7 + $0x8] sm:$0xff]
        %v734 = vld [vmem:[%s7 + $0x10] sm:$0xff]
        %v735 = vld [vmem:[%s7 + $0x18] sm:$0xff]
        %v736 = vld [vmem:[%s8] sm:$0x1]
        %v738 = vlaneseq
        %v739 = vshrl.u32 %v738, 7
        %v740 = vsub.s32 0, %v739
        %v741 = vrot.slane %v736, %v740
        %vm743 = vcmask 261120
        %v745 = vsel %vm743, %v731, 0
        %747 = vmatprep.subr.mxu0 0.0
        %748 = vmatpush1.msra.mxu0 0.0
        %749 = vmatprep.subr.mxu0 0.0
        %750 = vmatpush1.msra.mxu0 0.0
        %751 = vmatprep.subr.mxu0 0.0
        %752 = vmatpush1.msra.mxu0 0.0
        %753 = vmatprep.subr.mxu0 0.0
        %754 = vmatpush1.msra.mxu0 0.0
        %755 = vmatprep.subr.mxu0 0.0
        %756 = vmatpush1.msra.mxu0 0.0
        %757 = vmatprep.subr.mxu0 0.0
        %758 = vmatpush1.msra.mxu0 0.0
        %759 = vmatprep.subr.mxu0 0.0
        %760 = vmatpush1.msra.mxu0 0.0
        %761 = vmatprep.subr.mxu0 0.0
        %762 = vmatpush1.msra.mxu0 0.0
        %763 = vmatprep.subr.mxu0 0.0
        %764 = vmatpush1.msra.mxu0 0.0
        %765 = vmatprep.subr.mxu0 0.0
        %766 = vmatpush1.msra.mxu0 0.0
        %767 = vmatprep.subr.mxu0 0.0
        %768 = vmatpush1.msra.mxu0 0.0
        %769 = vmatprep.subr.mxu0 0.0
        %770 = vmatpush1.msra.mxu0 0.0
        %771 = vmatprep.subr.mxu0 0.0
        %772 = vmatpush1.msra.mxu0 %v735
        %773 = vmatprep.subr.mxu0 0.0
        %774 = vmatpush1.msra.mxu0 %v734
        %775 = vmatprep.subr.mxu0 0.0
        %776 = vmatpush1.msra.mxu0 %v733
        %777 = vmatprep.subr.mxu0 0.0
        %778 = vmatpush1.msra.mxu0 %v732
        %779 = vmatprep.subr.mxu0 0.0
        %780 = vmatpush2.msra.mxu0 0.0
        %781 = vmatprep.subr.mxu0 0.0
        %782 = vmatpush2.msra.mxu0 0.0
        %783 = vmatprep.subr.mxu0 0.0
        %784 = vmatpush2.msra.mxu0 0.0
        %785 = vmatprep.subr.mxu0 0.0
        %786 = vmatpush2.msra.mxu0 0.0
        %787 = vmatprep.subr.mxu0 0.0
        %788 = vmatpush2.msra.mxu0 0.0
        %789 = vmatprep.subr.mxu0 0.0
        %790 = vmatpush2.msra.mxu0 0.0
        %791 = vmatprep.subr.mxu0 0.0
        %792 = vmatpush2.msra.mxu0 0.0
        %793 = vmatprep.subr.mxu0 0.0
        %794 = vmatpush2.msra.mxu0 0.0
        %795 = vmatprep.subr.mxu0 0.0
        %796 = vmatpush2.msra.mxu0 0.0
        %797 = vmatprep.subr.mxu0 0.0
        %798 = vmatpush2.msra.mxu0 0.0
        %799 = vmatprep.subr.mxu0 0.0
        %800 = vmatpush2.msra.mxu0 0.0
        %801 = vmatprep.subr.mxu0 0.0
        %802 = vmatpush2.msra.mxu0 0.0
        %803 = vmatprep.subr.mxu0 0.0
        %804 = vmatpush2.msra.mxu0 0.0
        %805 = vmatprep.subr.mxu0 0.0
        %806 = vmatpush2.msra.mxu0 0.0
        %807 = vmatprep.subr.mxu0 0.0
        %808 = vmatpush2.msra.mxu0 0.0
        %809 = vmatprep.subr.mxu0 0.0
        %810 = vmatpush2.msra.mxu0 0.0
        %811 = vmatprep.mubr.f32.mxu0 0.0
        %812 = vmatmul.mubr.f32.gmra.mxu0 %v745
        %v813 = vpop.f32.mrf.mxu0
        %v814 = vadd.f32 %v741, %v813
        %v815 = vpop.f32.mrf.mxu0
        %816 = vdwg.mxu0
        %v817 = vtanh.pop %v814
        %v818 = vld [vmem:[%s9] sm:$0xff]
        %v819 = vld [vmem:[%s9 + $0x8] sm:$0xff]
        %v820 = vld [vmem:[%s9 + $0x10] sm:$0xff]
        %v821 = vld [vmem:[%s9 + $0x18] sm:$0xff]
        %v822 = vld [vmem:[%s10] sm:$0x1]
        %v824 = vlaneseq
        %v825 = vshrl.u32 %v824, 7
        %v826 = vsub.s32 0, %v825
        %v827 = vrot.slane %v822, %v826
        %v830 = vsel %vm743, %v817, 0
        %832 = vmatprep.subr.mxu0 0.0
        %833 = vmatpush1.msra.mxu0 0.0
        %834 = vmatprep.subr.mxu0 0.0
        %835 = vmatpush1.msra.mxu0 0.0
        %836 = vmatprep.subr.mxu0 0.0
        %837 = vmatpush1.msra.mxu0 0.0
        %838 = vmatprep.subr.mxu0 0.0
        %839 = vmatpush1.msra.mxu0 0.0
        %840 = vmatprep.subr.mxu0 0.0
        %841 = vmatpush1.msra.mxu0 0.0
        %842 = vmatprep.subr.mxu0 0.0
        %843 = vmatpush1.msra.mxu0 0.0
        %844 = vmatprep.subr.mxu0 0.0
        %845 = vmatpush1.msra.mxu0 0.0
        %846 = vmatprep.subr.mxu0 0.0
        %847 = vmatpush1.msra.mxu0 0.0
        %848 = vmatprep.subr.mxu0 0.0
        %849 = vmatpush1.msra.mxu0 0.0
        %850 = vmatprep.subr.mxu0 0.0
        %851 = vmatpush1.msra.mxu0 0.0
        %852 = vmatprep.subr.mxu0 0.0
        %853 = vmatpush1.msra.mxu0 0.0
        %854 = vmatprep.subr.mxu0 0.0
        %855 = vmatpush1.msra.mxu0 0.0
        %856 = vmatprep.subr.mxu0 0.0
        %857 = vmatpush1.msra.mxu0 %v821
        %858 = vmatprep.subr.mxu0 0.0
        %859 = vmatpush1.msra.mxu0 %v820
        %860 = vmatprep.subr.mxu0 0.0
        %861 = vmatpush1.msra.mxu0 %v819
        %862 = vmatprep.subr.mxu0 0.0
        %863 = vmatpush1.msra.mxu0 %v818
        %864 = vmatprep.subr.mxu0 0.0
        %865 = vmatpush2.msra.mxu0 0.0
        %866 = vmatprep.subr.mxu0 0.0
        %867 = vmatpush2.msra.mxu0 0.0
        %868 = vmatprep.subr.mxu0 0.0
        %869 = vmatpush2.msra.mxu0 0.0
        %870 = vmatprep.subr.mxu0 0.0
        %871 = vmatpush2.msra.mxu0 0.0
        %872 = vmatprep.subr.mxu0 0.0
        %873 = vmatpush2.msra.mxu0 0.0
        %874 = vmatprep.subr.mxu0 0.0
        %875 = vmatpush2.msra.mxu0 0.0
        %876 = vmatprep.subr.mxu0 0.0
        %877 = vmatpush2.msra.mxu0 0.0
        %878 = vmatprep.subr.mxu0 0.0
        %879 = vmatpush2.msra.mxu0 0.0
        %880 = vmatprep.subr.mxu0 0.0
        %881 = vmatpush2.msra.mxu0 0.0
        %882 = vmatprep.subr.mxu0 0.0
        %883 = vmatpush2.msra.mxu0 0.0
        %884 = vmatprep.subr.mxu0 0.0
        %885 = vmatpush2.msra.mxu0 0.0
        %886 = vmatprep.subr.mxu0 0.0
        %887 = vmatpush2.msra.mxu0 0.0
        %888 = vmatprep.subr.mxu0 0.0
        %889 = vmatpush2.msra.mxu0 0.0
        %890 = vmatprep.subr.mxu0 0.0
        %891 = vmatpush2.msra.mxu0 0.0
        %892 = vmatprep.subr.mxu0 0.0
        %893 = vmatpush2.msra.mxu0 0.0
        %894 = vmatprep.subr.mxu0 0.0
        %895 = vmatpush2.msra.mxu0 0.0
        %896 = vmatprep.mubr.f32.mxu0 0.0
        %897 = vmatmul.mubr.f32.gmra.mxu0 %v830
        %v898 = vpop.f32.mrf.mxu0
        %v899 = vadd.f32 %v827, %v898
        %v900 = vpop.f32.mrf.mxu0
        %901 = vdwg.mxu0
        %v902 = vtanh.pop %v899
        %v903 = vld [vmem:[%s11] sm:$0xff]
        %v904 = vld [vmem:[%s11 + $0x8] sm:$0xff]
        %v905 = vld [vmem:[%s11 + $0x10] sm:$0xff]
        %v906 = vld [vmem:[%s11 + $0x18] sm:$0xff]
        %v907 = vld [vmem:[%s11 + $0x20] sm:$0xff]
        %v908 = vld [vmem:[%s11 + $0x28] sm:$0xff]
        %v909 = vld [vmem:[%s11 + $0x30] sm:$0xff]
        %v910 = vld [vmem:[%s11 + $0x38] sm:$0xff]
        %v911 = vld [vmem:[%s12] sm:$0x1]
        %v913 = vlaneseq
        %v914 = vshrl.u32 %v913, 7
        %v915 = vsub.s32 0, %v914
        %v916 = vrot.slane %v911, %v915
        %v919 = vsel %vm657, %v902, 0
        %921 = vmatprep.subr.mxu0 0.0
        %922 = vmatpush1.msra.mxu0 0.0
        %923 = vmatprep.subr.mxu0 0.0
        %924 = vmatpush1.msra.mxu0 0.0
        %925 = vmatprep.subr.mxu0 0.0
        %926 = vmatpush1.msra.mxu0 0.0
        %927 = vmatprep.subr.mxu0 0.0
        %928 = vmatpush1.msra.mxu0 0.0
        %929 = vmatprep.subr.mxu0 0.0
        %930 = vmatpush1.msra.mxu0 0.0
        %931 = vmatprep.subr.mxu0 0.0
        %932 = vmatpush1.msra.mxu0 0.0
        %933 = vmatprep.subr.mxu0 0.0
        %934 = vmatpush1.msra.mxu0 0.0
        %935 = vmatprep.subr.mxu0 0.0
        %936 = vmatpush1.msra.mxu0 0.0
        %937 = vmatprep.subr.mxu0 0.0
        %938 = vmatpush1.msra.mxu0 %v910
        %939 = vmatprep.subr.mxu0 0.0
        %940 = vmatpush1.msra.mxu0 %v909
        %941 = vmatprep.subr.mxu0 0.0
        %942 = vmatpush1.msra.mxu0 %v908
        %943 = vmatprep.subr.mxu0 0.0
        %944 = vmatpush1.msra.mxu0 %v907
        %945 = vmatprep.subr.mxu0 0.0
        %946 = vmatpush1.msra.mxu0 %v906
        %947 = vmatprep.subr.mxu0 0.0
        %948 = vmatpush1.msra.mxu0 %v905
        %949 = vmatprep.subr.mxu0 0.0
        %950 = vmatpush1.msra.mxu0 %v904
        %951 = vmatprep.subr.mxu0 0.0
        %952 = vmatpush1.msra.mxu0 %v903
        %953 = vmatprep.subr.mxu0 0.0
        %954 = vmatpush2.msra.mxu0 0.0
        %955 = vmatprep.subr.mxu0 0.0
        %956 = vmatpush2.msra.mxu0 0.0
        %957 = vmatprep.subr.mxu0 0.0
        %958 = vmatpush2.msra.mxu0 0.0
        %959 = vmatprep.subr.mxu0 0.0
        %960 = vmatpush2.msra.mxu0 0.0
        %961 = vmatprep.subr.mxu0 0.0
        %962 = vmatpush2.msra.mxu0 0.0
        %963 = vmatprep.subr.mxu0 0.0
        %964 = vmatpush2.msra.mxu0 0.0
        %965 = vmatprep.subr.mxu0 0.0
        %966 = vmatpush2.msra.mxu0 0.0
        %967 = vmatprep.subr.mxu0 0.0
        %968 = vmatpush2.msra.mxu0 0.0
        %969 = vmatprep.subr.mxu0 0.0
        %970 = vmatpush2.msra.mxu0 0.0
        %971 = vmatprep.subr.mxu0 0.0
        %972 = vmatpush2.msra.mxu0 0.0
        %973 = vmatprep.subr.mxu0 0.0
        %974 = vmatpush2.msra.mxu0 0.0
        %975 = vmatprep.subr.mxu0 0.0
        %976 = vmatpush2.msra.mxu0 0.0
        %977 = vmatprep.subr.mxu0 0.0
        %978 = vmatpush2.msra.mxu0 0.0
        %979 = vmatprep.subr.mxu0 0.0
        %980 = vmatpush2.msra.mxu0 0.0
        %981 = vmatprep.subr.mxu0 0.0
        %982 = vmatpush2.msra.mxu0 0.0
        %983 = vmatprep.subr.mxu0 0.0
        %984 = vmatpush2.msra.mxu0 0.0
        %985 = vmatprep.mubr.f32.mxu0 0.0
        %986 = vmatmul.mubr.f32.gmra.mxu0 %v919
        %v987 = vpop.f32.mrf.mxu0
        %v988 = vadd.f32 %v916, %v987
        %v989 = vpop.f32.mrf.mxu0
        %990 = vdwg.mxu0
        %vm991 = vcmask 220160
        %992 = vst.msk [vmem:[%s444] sm:$0xff] %vm991, %v988
        %s993 = sand.u32 %s318, 1
        %s994 = scalar_lea.sflag [#allocation3], %s993
        %s995 = sand.u32 %s318, 1
        %s996 = smul.addr %s995, 8
        %s997 = scalar_lea.vmem [#allocation2], %s996
        // Predicated region
        $region73: #{tpu_custom_call.1} parent=71 // pred_check
          %p998 = pneg %p328
        $region74: #{tpu_custom_call.1} parent=71 // pred_check_branch
          %1000 = sbr.rel (%p998) target = $region76
        $region75: #{tpu_custom_call.1} parent=71 // pred_region
          %s1002 = ssub.s32 128, 128
          %1003 = vsyncadd %s994, %s1002
          %s1004 = smul.addr %s27, 128
          %s1005 = scalar_lea.hbm %s13, %s1004
          %s1007 = sshll.u32 %s997, 4
          %s1008 = int_to_ptr.vmem [resolvable:$true] %s1007
          %1010 = dma.vmem_to_hbm [thread:$0]  %s1008, 128, %s1005, %s994
        $region76: #{tpu_custom_call.1} parent=71 // pred_fallthru
          _
      $region72: #{tpu_custom_call.1} parent=5 // pred_fallthru
        _
      %p1011 = scmp.le.s32.totalorder 2, %s22
      // Predicated region
      $region77: #{tpu_custom_call.1} parent=5 // pred_check
        %p1012 = pneg %p1011
      $region78: #{tpu_custom_call.1} parent=5 // pred_check_branch
        %1014 = sbr.rel (%p1012) target = $region80
      $region79: #{tpu_custom_call.1} parent=5 // pred_region
        %s1015 = ssub.s32 %s22, 2
        // Predicated region
        $region81: #{tpu_custom_call.1} parent=79 // pred_check
          %p1016 = pneg %p334
        $region82: #{tpu_custom_call.1} parent=79 // pred_check_branch
          %1018 = sbr.rel (%p1016) target = $region84
        $region83: #{tpu_custom_call.1} parent=79 // pred_region
          %s1019 = sand.u32 %s319, 1
          %s1020 = scalar_lea.sflag [#allocation3], %s1019
          %s1021 = sand.u32 %s319, 1
          %s1022 = smul.addr %s1021, 8
          %s1023 = scalar_lea.vmem [#allocation2], %s1022
          %1024 = dma.done %s1020, 128
        $region84: #{tpu_custom_call.1} parent=79 // pred_fallthru
          _
      $region80: #{tpu_custom_call.1} parent=5 // pred_fallthru
        _
    $region6: #{tpu_custom_call.1} parent=1 // loop_footer
      %s26 = sadd.s32 1, %s22
    $region7: #{tpu_custom_call.1} parent=1 // loop_footer_branch
      %21 = sbr.rel target = $region3
    $region8: #{tpu_custom_call.1} parent=1 // loop_exit
      _
    %1025 = vsyncpa [#allocation3], 1
    %s1026 = scalar_lea.sflag [#allocation3], 1
    %1027 = vsyncpa %s1026, 1

</llo_original>
